<compile_context>
chip_gen: v6e
topology: v6e:2x2x1
jax: 0.10.0
libtpu: 0.0.40
codegen_flags: <defaults>
</compile_context>

<pallas_src>
import functools

import jax
import jax.numpy as jnp
from jax.experimental import pallas as pl
from jax.experimental.pallas import tpu as pltpu

IN_FEATURES = 768
FC2_OUT = 32
FINAL_OUT = 2


def _round_up(x, m):
    return (x + m - 1) // m * m


def _mlp_kernel(x_ref, w1_ref, w2_ref, w3_ref, b_ref, o_ref):
    """relu(fc1) -> dropout(identity) -> relu(fc2) -> final for one batch tile."""
    hidden_dim = w1_ref.shape[1]

    x = x_ref[...]                                   # (TB, 768) bf16

    # Packed biases: row 0 = b1, row 1 = b2, row 2 = b3 (f32, lane-padded).
    b = b_ref[...]
    b1 = b[0:1, :hidden_dim]
    b2 = b[1:2, :FC2_OUT]
    b3 = b[2:3, :FINAL_OUT]

    # fc1 + relu: bf16 MXU matmul with f32 accumulation, bias/relu in f32.
    h1 = jnp.dot(x, w1_ref[...], preferred_element_type=jnp.float32)
    h1 = jnp.maximum(h1 + b1, 0.0)

    # dropout -> identity (eval / inference mode)

    # fc2 + relu
    h2 = jnp.dot(h1.astype(jnp.bfloat16), w2_ref[...],
                 preferred_element_type=jnp.float32)
    h2 = jnp.maximum(h2 + b2, 0.0)

    # final (32 -> 2)
    # TODO(synk): for tiny latency-bound batches this N=2 layer could run on
    # the VPU to skip a third MXU round trip; negligible at the streaming
    # batch sizes this kernel is tiled for, so keep the dot.
    out = jnp.dot(h2.astype(jnp.bfloat16), w3_ref[...],
                  preferred_element_type=jnp.float32)
    o_ref[...] = (out + b3).astype(o_ref.dtype)


@functools.partial(jax.jit, static_argnames=("block_rows",))
def current_forward(tweet_features, params, *, block_rows=1024):
    """Runs the Current-module forward pass as a single Pallas TPU kernel."""
    w1, b1, w2, b2, w3, b3 = params
    hidden_dim = w1.shape[1]
    B = tweet_features.shape[0]

    # Batch tile: multiple of 8, no larger than the (rounded) batch itself.
    TB = min(_round_up(block_rows, 8), _round_up(B, 8))
    nb = pl.cdiv(B, TB)
    B_pad = nb * TB

    # bf16 inputs/weights (f32 accumulation happens inside the kernel).
    x = tweet_features.astype(jnp.bfloat16)
    if B_pad != B:
        x = jnp.pad(x, ((0, B_pad - B), (0, 0)))
    w1b = w1.astype(jnp.bfloat16)
    w2b = w2.astype(jnp.bfloat16)
    w3b = w3.astype(jnp.bfloat16)

    # Pack the three biases into one lane-padded f32 buffer (1 DMA instead of 3).
    P = _round_up(max(hidden_dim, FC2_OUT, FINAL_OUT), 128)
    biases = jnp.zeros((3, P), jnp.float32)
    biases = biases.at[0, :hidden_dim].set(b1.reshape(-1))
    biases = biases.at[1, :FC2_OUT].set(b2.reshape(-1))
    biases = biases.at[2, :FINAL_OUT].set(b3.reshape(-1))

    resident = lambda a: pl.BlockSpec(a.shape, lambda i: (0, 0))  # fetched once

    out = pl.pallas_call(
        _mlp_kernel,
        out_shape=jax.ShapeDtypeStruct((B_pad, FINAL_OUT), jnp.float32),
        grid=(nb,),
        in_specs=[
            pl.BlockSpec((TB, IN_FEATURES), lambda i: (i, 0)),   # stream x
            resident(w1b),
            resident(w2b),
            resident(w3b),
            resident(biases),
        ],
        out_specs=pl.BlockSpec((TB, FINAL_OUT), lambda i: (i, 0)),
        compiler_params=pltpu.CompilerParams(
            dimension_semantics=("parallel",),        # shards across v7x's 2 TCs
            vmem_limit_bytes=32 * 1024 * 1024,        # safe on v5e/v6e/v7x
        ),
    )(x, w1b, w2b, w3b, biases)

    return out[:B]


def init_params(key, hidden_dim):
    """Deterministic PyTorch-Linear-style init: U(-1/sqrt(fan_in), 1/sqrt(fan_in))."""
    def linear(k, fan_in, fan_out):
        kw, kb = jax.random.split(k)
        bound = 1.0 / jnp.sqrt(fan_in)
        w = jax.random.uniform(kw, (fan_in, fan_out), jnp.float32, -bound, bound)
        b = jax.random.uniform(kb, (1, fan_out), jnp.float32, -bound, bound)
        return w, b

    k1, k2, k3 = jax.random.split(key, 3)
    w1, b1 = linear(k1, IN_FEATURES, hidden_dim)
    w2, b2 = linear(k2, hidden_dim, FC2_OUT)
    w3, b3 = linear(k3, FC2_OUT, FINAL_OUT)
    return (w1, b1, w2, b2, w3, b3)


def reference_forward(tweet_features, params):
    """Plain-JAX reference with the same bf16-input / f32-accumulate numerics."""
    w1, b1, w2, b2, w3, b3 = params
    xb = tweet_features.astype(jnp.bfloat16)
    w1b, w2b, w3b = (w.astype(jnp.bfloat16) for w in (w1, w2, w3))
    h1 = jnp.maximum(
        jnp.dot(xb, w1b, preferred_element_type=jnp.float32) + b1, 0.0)
    h2 = jnp.maximum(
        jnp.dot(h1.astype(jnp.bfloat16), w2b,
                preferred_element_type=jnp.float32) + b2, 0.0)
    return jnp.dot(h2.astype(jnp.bfloat16), w3b,
                   preferred_element_type=jnp.float32) + b3


if __name__ == "__main__":
    hidden_dim = 32
    key = jax.random.PRNGKey(0)
    k_x, k_p, k_x2 = jax.random.split(key, 3)
    params = init_params(k_p, hidden_dim)

    # Small-shape check (single grid step).
    B = 8
    tweet_features = jax.random.normal(k_x, (B, IN_FEATURES), jnp.float32)
    # Unused forward args (kept for interface fidelity with the PyTorch module).
    historic_features = jnp.zeros((B, 16), jnp.float32)
    lens = jnp.full((B,), 16, jnp.int32)
    timestamp = jnp.zeros((B,), jnp.float32)

    out = jax.block_until_ready(current_forward(tweet_features, params))
    ref = reference_forward(tweet_features, params)
    assert out.shape == (B, FINAL_OUT), out.shape
    assert jnp.allclose(out, ref, atol=1e-3, rtol=1e-3), "mismatch vs reference"

    # Multi-step grid + ragged-tail check (B not a multiple of the tile).
    B2 = 20
    x2 = jax.random.normal(k_x2, (B2, IN_FEATURES), jnp.float32)
    out2 = jax.block_until_ready(current_forward(x2, params, block_rows=8))
    ref2 = reference_forward(x2, params)
    assert out2.shape == (B2, FINAL_OUT), out2.shape
    assert jnp.allclose(out2, ref2, atol=1e-3, rtol=1e-3), "mismatch (ragged batch)"

    print("KERNEL_OK")
</pallas_src>

<mosaic_0001>
module attributes {stable_mosaic.version = 11 : i64} {
  func.func @_mlp_kernel(%arg0: i32, %arg1: memref<8x768xbf16, #tpu.memory_space<vmem>>, %arg2: memref<768x32xbf16, #tpu.memory_space<vmem>>, %arg3: memref<32x32xbf16, #tpu.memory_space<vmem>>, %arg4: memref<32x2xbf16, #tpu.memory_space<vmem>>, %arg5: memref<3x128xf32, #tpu.memory_space<vmem>>, %arg6: memref<8x2xf32, #tpu.memory_space<vmem>>) attributes {dimension_semantics = [#tpu.dimension_semantics<parallel>], iteration_bounds = array<i64: 1>, scalar_prefetch = 0 : i64, scratch_operands = 0 : i64, tpu.core_type = #tpu.core_type<tc>, window_params = [{transform_indices = @transform_0, window_bounds = array<i64: 8, 768>}, {pipeline_mode = #tpu.pipeline_mode<synchronous>, transform_indices = @transform_1, window_bounds = array<i64: 768, 32>}, {pipeline_mode = #tpu.pipeline_mode<synchronous>, transform_indices = @transform_2, window_bounds = array<i64: 32, 32>}, {pipeline_mode = #tpu.pipeline_mode<synchronous>, transform_indices = @transform_3, window_bounds = array<i64: 32, 2>}, {pipeline_mode = #tpu.pipeline_mode<synchronous>, transform_indices = @transform_4, window_bounds = array<i64: 3, 128>}, {transform_indices = @transform_5, window_bounds = array<i64: 8, 2>}]} {
    %c0 = arith.constant 0 : index
    %c0_0 = arith.constant 0 : index
    %0 = vector.load %arg1[%c0, %c0_0] : memref<8x768xbf16, #tpu.memory_space<vmem>>, vector<8x768xbf16>
    %c0_1 = arith.constant 0 : index
    %c0_2 = arith.constant 0 : index
    %1 = vector.load %arg5[%c0_1, %c0_2] : memref<3x128xf32, #tpu.memory_space<vmem>>, vector<3x128xf32>
    %2 = vector.extract_strided_slice %1 {offsets = [0, 0], sizes = [1, 32], strides = [1, 1]} : vector<3x128xf32> to vector<1x32xf32>
    %3 = vector.extract_strided_slice %1 {offsets = [1, 0], sizes = [1, 32], strides = [1, 1]} : vector<3x128xf32> to vector<1x32xf32>
    %4 = vector.extract_strided_slice %1 {offsets = [2, 0], sizes = [1, 2], strides = [1, 1]} : vector<3x128xf32> to vector<1x2xf32>
    %c0_3 = arith.constant 0 : index
    %c0_4 = arith.constant 0 : index
    %5 = vector.load %arg2[%c0_3, %c0_4] : memref<768x32xbf16, #tpu.memory_space<vmem>>, vector<768x32xbf16>
    %cst = arith.constant dense<0.000000e+00> : vector<8x32xf32>
    %6 = tpu.matmul %0, %5, %cst {dimension_numbers = #tpu.dot_dimension_numbers<[1], [0], [0], [1], [0, 0, 1, 1], [], []>} : vector<8x768xbf16>, vector<768x32xbf16>, vector<8x32xf32> -> vector<8x32xf32>
    %7 = vector.broadcast %2 : vector<1x32xf32> to vector<8x32xf32>
    %8 = arith.addf %6, %7 : vector<8x32xf32>
    %cst_5 = arith.constant 0.000000e+00 : f32
    %9 = vector.broadcast %cst_5 : f32 to vector<8x32xf32>
    %10 = arith.maximumf %8, %9 : vector<8x32xf32>
    %11 = arith.truncf %10 : vector<8x32xf32> to vector<8x32xbf16>
    %c0_6 = arith.constant 0 : index
    %c0_7 = arith.constant 0 : index
    %12 = vector.load %arg3[%c0_6, %c0_7] : memref<32x32xbf16, #tpu.memory_space<vmem>>, vector<32x32xbf16>
    %cst_8 = arith.constant dense<0.000000e+00> : vector<8x32xf32>
    %13 = tpu.matmul %11, %12, %cst_8 {dimension_numbers = #tpu.dot_dimension_numbers<[1], [0], [0], [1], [0, 0, 1, 1], [], []>} : vector<8x32xbf16>, vector<32x32xbf16>, vector<8x32xf32> -> vector<8x32xf32>
    %14 = vector.broadcast %3 : vector<1x32xf32> to vector<8x32xf32>
    %15 = arith.addf %13, %14 : vector<8x32xf32>
    %cst_9 = arith.constant 0.000000e+00 : f32
    %16 = vector.broadcast %cst_9 : f32 to vector<8x32xf32>
    %17 = arith.maximumf %15, %16 : vector<8x32xf32>
    %18 = arith.truncf %17 : vector<8x32xf32> to vector<8x32xbf16>
    %c0_10 = arith.constant 0 : index
    %c0_11 = arith.constant 0 : index
    %19 = vector.load %arg4[%c0_10, %c0_11] : memref<32x2xbf16, #tpu.memory_space<vmem>>, vector<32x2xbf16>
    %cst_12 = arith.constant dense<0.000000e+00> : vector<8x2xf32>
    %20 = tpu.matmul %18, %19, %cst_12 {dimension_numbers = #tpu.dot_dimension_numbers<[1], [0], [0], [1], [0, 0, 1, 1], [], []>} : vector<8x32xbf16>, vector<32x2xbf16>, vector<8x2xf32> -> vector<8x2xf32>
    %21 = vector.broadcast %4 : vector<1x2xf32> to vector<8x2xf32>
    %22 = arith.addf %20, %21 : vector<8x2xf32>
    %c0_13 = arith.constant 0 : index
    %c0_14 = arith.constant 0 : index
    %23 = vector.load %arg6[%c0_13, %c0_14] : memref<8x2xf32, #tpu.memory_space<vmem>>, vector<8x2xf32>
    tpu.vector_store %arg6[%c0_13, %c0_14], %22 {strides = array<i32>} : memref<8x2xf32, #tpu.memory_space<vmem>>, vector<8x2xf32>,
    return
  }
  func.func @transform_0(%arg0: i32) -> (i32, i32) {
    %c0_i32 = arith.constant 0 : i32
    %c0_i32_0 = arith.constant 0 : i32
    return %arg0, %c0_i32 : i32, i32
  }
  func.func @transform_1(%arg0: i32) -> (i32, i32) {
    %c0_i32 = arith.constant 0 : i32
    %c0_i32_0 = arith.constant 0 : i32
    %c0_i32_1 = arith.constant 0 : i32
    return %c0_i32, %c0_i32_0 : i32, i32
  }
  func.func @transform_2(%arg0: i32) -> (i32, i32) {
    %c0_i32 = arith.constant 0 : i32
    %c0_i32_0 = arith.constant 0 : i32
    %c0_i32_1 = arith.constant 0 : i32
    return %c0_i32, %c0_i32_0 : i32, i32
  }
  func.func @transform_3(%arg0: i32) -> (i32, i32) {
    %c0_i32 = arith.constant 0 : i32
    %c0_i32_0 = arith.constant 0 : i32
    %c0_i32_1 = arith.constant 0 : i32
    return %c0_i32, %c0_i32_0 : i32, i32
  }
  func.func @transform_4(%arg0: i32) -> (i32, i32) {
    %c0_i32 = arith.constant 0 : i32
    %c0_i32_0 = arith.constant 0 : i32
    %c0_i32_1 = arith.constant 0 : i32
    return %c0_i32, %c0_i32_0 : i32, i32
  }
  func.func @transform_5(%arg0: i32) -> (i32, i32) {
    %c0_i32 = arith.constant 0 : i32
    %c0_i32_0 = arith.constant 0 : i32
    return %arg0, %c0_i32 : i32, i32
  }
}

</mosaic_0001>

<llo_original>
// kernel: current_forward.1
$region0: #{current_forward.1}
  #allocation0 [shape = 'u32[]', space=smem, size = 0x4, offset = 0x4, fixed_abs, tag = 'smem constant byte address 0x4 - core index']
  #allocation1 [shape = 'u32[144,128]{1,0:T(1,128)}', space=vmem, size = 0x12000, scoped, tag = 'internal scratch']
  %s0 = inlined_call_operand.vmem [shape: bf16[8,768], index: 0, kind: input, shape index: {}]
  %s1 = inlined_call_operand.vmem [shape: bf16[768,32], index: 1, kind: input, shape index: {}]
  %s2 = inlined_call_operand.vmem [shape: bf16[32,32], index: 2, kind: input, shape index: {}]
  %s3 = inlined_call_operand.vmem [shape: bf16[32,2], index: 3, kind: input, shape index: {}]
  %s4 = inlined_call_operand.vmem [shape: f32[3,128], index: 4, kind: input, shape index: {}]
  %s5 = inlined_call_operand.vmem [shape: f32[8,2], index: 5, kind: output, shape index: {}]
  %s6 = sld [smem:[#allocation0]]
  $region30: #{current_forward.1} parent=0
    _
  %s8 = ssub.s32 1, %s6
  %s9 = scalar_select 0, %s8, %s6
  // Predicated region
  $region2: #{current_forward.1} parent=0 // pred_check
    _
  $region3: #{current_forward.1} parent=0 // pred_check_branch
    %11 = sbr.rel (0) target = $region5
  $region4: #{current_forward.1} parent=0 // pred_region
    _
  $region5: #{current_forward.1} parent=0 // pred_fallthru
    _
  // Predicated region
  $region6: #{current_forward.1} parent=0 // pred_check
    _
  $region7: #{current_forward.1} parent=0 // pred_check_branch
    %13 = sbr.rel (0) target = $region9
  $region8: #{current_forward.1} parent=0 // pred_region
    _
  $region9: #{current_forward.1} parent=0 // pred_fallthru
    _
  // Predicated region
  $region10: #{current_forward.1} parent=0 // pred_check
    _
  $region11: #{current_forward.1} parent=0 // pred_check_branch
    %15 = sbr.rel (0) target = $region13
  $region12: #{current_forward.1} parent=0 // pred_region
    _
  $region13: #{current_forward.1} parent=0 // pred_fallthru
    _
  // Predicated region
  $region14: #{current_forward.1} parent=0 // pred_check
    _
  $region15: #{current_forward.1} parent=0 // pred_check_branch
    %17 = sbr.rel (0) target = $region17
  $region16: #{current_forward.1} parent=0 // pred_region
    _
  $region17: #{current_forward.1} parent=0 // pred_fallthru
    _
  // Predicated region
  $region18: #{current_forward.1} parent=0 // pred_check
    _
  $region19: #{current_forward.1} parent=0 // pred_check_branch
    %19 = sbr.rel (0) target = $region21
  $region20: #{current_forward.1} parent=0 // pred_region
    _
  $region21: #{current_forward.1} parent=0 // pred_fallthru
    _
  %v21 = vld [vmem:[%s0] sm:$0xff]
  %v22 = vld [vmem:[%s0 + $0x8] sm:$0xff]
  %v23 = vld [vmem:[%s0 + $0x10] sm:$0xff]
  %v24 = vld [vmem:[%s4] sm:$0x7]
  %v25 = vld [vmem:[%s1] sm:$0xf]
  %v26 = vld [vmem:[%s1 + $0x4] sm:$0xf]
  %v27 = vld [vmem:[%s1 + $0x8] sm:$0xf]
  %v28 = vld [vmem:[%s1 + $0xc] sm:$0xf]
  %v29 = vld [vmem:[%s1 + $0x10] sm:$0xf]
  %v30 = vld [vmem:[%s1 + $0x14] sm:$0xf]
  %v31 = vld [vmem:[%s1 + $0x18] sm:$0xf]
  %v32 = vld [vmem:[%s1 + $0x1c] sm:$0xf]
  %v33 = vld [vmem:[%s1 + $0x20] sm:$0xf]
  %v34 = vld [vmem:[%s1 + $0x24] sm:$0xf]
  %v35 = vld [vmem:[%s1 + $0x28] sm:$0xf]
  %v36 = vld [vmem:[%s1 + $0x2c] sm:$0xf]
  %v37 = vld [vmem:[%s1 + $0x30] sm:$0xf]
  %v38 = vld [vmem:[%s1 + $0x34] sm:$0xf]
  %v39 = vld [vmem:[%s1 + $0x38] sm:$0xf]
  %v40 = vld [vmem:[%s1 + $0x3c] sm:$0xf]
  %v41 = vld [vmem:[%s1 + $0x40] sm:$0xf]
  %v42 = vld [vmem:[%s1 + $0x44] sm:$0xf]
  %v43 = vld [vmem:[%s1 + $0x48] sm:$0xf]
  %v44 = vld [vmem:[%s1 + $0x4c] sm:$0xf]
  %v45 = vld [vmem:[%s1 + $0x50] sm:$0xf]
  %v46 = vld [vmem:[%s1 + $0x54] sm:$0xf]
  %v47 = vld [vmem:[%s1 + $0x58] sm:$0xf]
  %v48 = vld [vmem:[%s1 + $0x5c] sm:$0xf]
  %v49 = vld [vmem:[%s1 + $0x60] sm:$0xf]
  %v50 = vld [vmem:[%s1 + $0x64] sm:$0xf]
  %v51 = vld [vmem:[%s1 + $0x68] sm:$0xf]
  %v52 = vld [vmem:[%s1 + $0x6c] sm:$0xf]
  %v53 = vld [vmem:[%s1 + $0x70] sm:$0xf]
  %v54 = vld [vmem:[%s1 + $0x74] sm:$0xf]
  %v55 = vld [vmem:[%s1 + $0x78] sm:$0xf]
  %v56 = vld [vmem:[%s1 + $0x7c] sm:$0xf]
  %v57 = vld [vmem:[%s1 + $0x80] sm:$0xf]
  %v58 = vld [vmem:[%s1 + $0x84] sm:$0xf]
  %v59 = vld [vmem:[%s1 + $0x88] sm:$0xf]
  %v60 = vld [vmem:[%s1 + $0x8c] sm:$0xf]
  %v61 = vld [vmem:[%s1 + $0x90] sm:$0xf]
  %v62 = vld [vmem:[%s1 + $0x94] sm:$0xf]
  %v63 = vld [vmem:[%s1 + $0x98] sm:$0xf]
  %v64 = vld [vmem:[%s1 + $0x9c] sm:$0xf]
  %v65 = vld [vmem:[%s1 + $0xa0] sm:$0xf]
  %v66 = vld [vmem:[%s1 + $0xa4] sm:$0xf]
  %v67 = vld [vmem:[%s1 + $0xa8] sm:$0xf]
  %v68 = vld [vmem:[%s1 + $0xac] sm:$0xf]
  %v69 = vld [vmem:[%s1 + $0xb0] sm:$0xf]
  %v70 = vld [vmem:[%s1 + $0xb4] sm:$0xf]
  %v71 = vld [vmem:[%s1 + $0xb8] sm:$0xf]
  %v72 = vld [vmem:[%s1 + $0xbc] sm:$0xf]
  %v73 = vld [vmem:[%s1 + $0xc0] sm:$0xf]
  %v74 = vld [vmem:[%s1 + $0xc4] sm:$0xf]
  %v75 = vld [vmem:[%s1 + $0xc8] sm:$0xf]
  %v76 = vld [vmem:[%s1 + $0xcc] sm:$0xf]
  %v77 = vld [vmem:[%s1 + $0xd0] sm:$0xf]
  %v78 = vld [vmem:[%s1 + $0xd4] sm:$0xf]
  %v79 = vld [vmem:[%s1 + $0xd8] sm:$0xf]
  %v80 = vld [vmem:[%s1 + $0xdc] sm:$0xf]
  %v81 = vld [vmem:[%s1 + $0xe0] sm:$0xf]
  %v82 = vld [vmem:[%s1 + $0xe4] sm:$0xf]
  %v83 = vld [vmem:[%s1 + $0xe8] sm:$0xf]
  %v84 = vld [vmem:[%s1 + $0xec] sm:$0xf]
  %v85 = vld [vmem:[%s1 + $0xf0] sm:$0xf]
  %v86 = vld [vmem:[%s1 + $0xf4] sm:$0xf]
  %v87 = vld [vmem:[%s1 + $0xf8] sm:$0xf]
  %v88 = vld [vmem:[%s1 + $0xfc] sm:$0xf]
  %v89 = vld [vmem:[%s1 + $0x100] sm:$0xf]
  %v90 = vld [vmem:[%s1 + $0x104] sm:$0xf]
  %v91 = vld [vmem:[%s1 + $0x108] sm:$0xf]
  %v92 = vld [vmem:[%s1 + $0x10c] sm:$0xf]
  %v93 = vld [vmem:[%s1 + $0x110] sm:$0xf]
  %v94 = vld [vmem:[%s1 + $0x114] sm:$0xf]
  %v95 = vld [vmem:[%s1 + $0x118] sm:$0xf]
  %v96 = vld [vmem:[%s1 + $0x11c] sm:$0xf]
  %v97 = vld [vmem:[%s1 + $0x120] sm:$0xf]
  %v98 = vld [vmem:[%s1 + $0x124] sm:$0xf]
  %v99 = vld [vmem:[%s1 + $0x128] sm:$0xf]
  %v100 = vld [vmem:[%s1 + $0x12c] sm:$0xf]
  %v101 = vld [vmem:[%s1 + $0x130] sm:$0xf]
  %v102 = vld [vmem:[%s1 + $0x134] sm:$0xf]
  %v103 = vld [vmem:[%s1 + $0x138] sm:$0xf]
  %v104 = vld [vmem:[%s1 + $0x13c] sm:$0xf]
  %v105 = vld [vmem:[%s1 + $0x140] sm:$0xf]
  %v106 = vld [vmem:[%s1 + $0x144] sm:$0xf]
  %v107 = vld [vmem:[%s1 + $0x148] sm:$0xf]
  %v108 = vld [vmem:[%s1 + $0x14c] sm:$0xf]
  %v109 = vld [vmem:[%s1 + $0x150] sm:$0xf]
  %v110 = vld [vmem:[%s1 + $0x154] sm:$0xf]
  %v111 = vld [vmem:[%s1 + $0x158] sm:$0xf]
  %v112 = vld [vmem:[%s1 + $0x15c] sm:$0xf]
  %v113 = vld [vmem:[%s1 + $0x160] sm:$0xf]
  %v114 = vld [vmem:[%s1 + $0x164] sm:$0xf]
  %v115 = vld [vmem:[%s1 + $0x168] sm:$0xf]
  %v116 = vld [vmem:[%s1 + $0x16c] sm:$0xf]
  %v117 = vld [vmem:[%s1 + $0x170] sm:$0xf]
  %v118 = vld [vmem:[%s1 + $0x174] sm:$0xf]
  %v119 = vld [vmem:[%s1 + $0x178] sm:$0xf]
  %v120 = vld [vmem:[%s1 + $0x17c] sm:$0xf]
  %v121 = vlaneseq
  %v122 = vshrl.u32 %v121, 7
  %v123 = vsub.s32 0, %v122
  %v124 = vrot.slane %v24, %v123
  %v128 = vunpack.c.l.b16 %v21
  %v129 = vunpack.c.h.b16 %v21
  %v130 = vunpack.c.l.b16 %v22
  %v131 = vunpack.c.h.b16 %v22
  %v132 = vunpack.c.l.b16 %v23
  %v133 = vunpack.c.h.b16 %v23
  %v134 = vpack.c.b16 %v128, %v128
  %v135 = vpack.c.b16 %v129, %v129
  %v136 = vpack.c.b16 %v130, %v130
  %v137 = vpack.c.b16 %v131, %v131
  %v138 = vpack.c.b16 %v132, %v132
  %v139 = vpack.c.b16 %v133, %v133
  %v242 = vunpack.c.l.b16 %v25
  %v243 = vunpack.c.l.b16 %v26
  %v244 = vunpack.c.l.b16 %v27
  %v245 = vunpack.c.l.b16 %v28
  %v246 = vunpack.c.l.b16 %v29
  %v247 = vunpack.c.l.b16 %v30
  %v248 = vunpack.c.l.b16 %v31
  %v249 = vunpack.c.l.b16 %v32
  %v250 = vunpack.c.l.b16 %v33
  %v251 = vunpack.c.l.b16 %v34
  %v252 = vunpack.c.l.b16 %v35
  %v253 = vunpack.c.l.b16 %v36
  %v254 = vunpack.c.l.b16 %v37
  %v255 = vunpack.c.l.b16 %v38
  %v256 = vunpack.c.l.b16 %v39
  %v257 = vunpack.c.l.b16 %v40
  %v258 = vunpack.c.l.b16 %v41
  %v259 = vunpack.c.l.b16 %v42
  %v260 = vunpack.c.l.b16 %v43
  %v261 = vunpack.c.l.b16 %v44
  %v262 = vunpack.c.l.b16 %v45
  %v263 = vunpack.c.l.b16 %v46
  %v264 = vunpack.c.l.b16 %v47
  %v265 = vunpack.c.l.b16 %v48
  %v266 = vunpack.c.l.b16 %v49
  %v267 = vunpack.c.l.b16 %v50
  %v268 = vunpack.c.l.b16 %v51
  %v269 = vunpack.c.l.b16 %v52
  %v270 = vunpack.c.l.b16 %v53
  %v271 = vunpack.c.l.b16 %v54
  %v272 = vunpack.c.l.b16 %v55
  %v273 = vunpack.c.l.b16 %v56
  %v274 = vunpack.c.l.b16 %v57
  %v275 = vunpack.c.l.b16 %v58
  %v276 = vunpack.c.l.b16 %v59
  %v277 = vunpack.c.l.b16 %v60
  %v278 = vunpack.c.l.b16 %v61
  %v279 = vunpack.c.l.b16 %v62
  %v280 = vunpack.c.l.b16 %v63
  %v281 = vunpack.c.l.b16 %v64
  %v282 = vunpack.c.l.b16 %v65
  %v283 = vunpack.c.l.b16 %v66
  %v284 = vunpack.c.l.b16 %v67
  %v285 = vunpack.c.l.b16 %v68
  %v286 = vunpack.c.l.b16 %v69
  %v287 = vunpack.c.l.b16 %v70
  %v288 = vunpack.c.l.b16 %v71
  %v289 = vunpack.c.l.b16 %v72
  %v290 = vunpack.c.l.b16 %v73
  %v291 = vunpack.c.l.b16 %v74
  %v292 = vunpack.c.l.b16 %v75
  %v293 = vunpack.c.l.b16 %v76
  %v294 = vunpack.c.l.b16 %v77
  %v295 = vunpack.c.l.b16 %v78
  %v296 = vunpack.c.l.b16 %v79
  %v297 = vunpack.c.l.b16 %v80
  %v298 = vunpack.c.l.b16 %v81
  %v299 = vunpack.c.l.b16 %v82
  %v300 = vunpack.c.l.b16 %v83
  %v301 = vunpack.c.l.b16 %v84
  %v302 = vunpack.c.l.b16 %v85
  %v303 = vunpack.c.l.b16 %v86
  %v304 = vunpack.c.l.b16 %v87
  %v305 = vunpack.c.l.b16 %v88
  %v306 = vunpack.c.l.b16 %v89
  %v307 = vunpack.c.l.b16 %v90
  %v308 = vunpack.c.l.b16 %v91
  %v309 = vunpack.c.l.b16 %v92
  %v310 = vunpack.c.l.b16 %v93
  %v311 = vunpack.c.l.b16 %v94
  %v312 = vunpack.c.l.b16 %v95
  %v313 = vunpack.c.l.b16 %v96
  %v314 = vunpack.c.l.b16 %v97
  %v315 = vunpack.c.l.b16 %v98
  %v316 = vunpack.c.l.b16 %v99
  %v317 = vunpack.c.l.b16 %v100
  %v318 = vunpack.c.l.b16 %v101
  %v319 = vunpack.c.l.b16 %v102
  %v320 = vunpack.c.l.b16 %v103
  %v321 = vunpack.c.l.b16 %v104
  %v322 = vunpack.c.l.b16 %v105
  %v323 = vunpack.c.l.b16 %v106
  %v324 = vunpack.c.l.b16 %v107
  %v325 = vunpack.c.l.b16 %v108
  %v326 = vunpack.c.l.b16 %v109
  %v327 = vunpack.c.l.b16 %v110
  %v328 = vunpack.c.l.b16 %v111
  %v329 = vunpack.c.l.b16 %v112
  %v330 = vunpack.c.l.b16 %v113
  %v331 = vunpack.c.l.b16 %v114
  %v332 = vunpack.c.l.b16 %v115
  %v333 = vunpack.c.l.b16 %v116
  %v334 = vunpack.c.l.b16 %v117
  %v335 = vunpack.c.l.b16 %v118
  %v336 = vunpack.c.l.b16 %v119
  %v337 = vunpack.c.l.b16 %v120
  %v338 = vpack.c.b16 %v243, %v242
  %v339 = vpack.c.b16 %v245, %v244
  %v340 = vpack.c.b16 %v247, %v246
  %v341 = vpack.c.b16 %v249, %v248
  %v342 = vpack.c.b16 %v251, %v250
  %v343 = vpack.c.b16 %v253, %v252
  %v344 = vpack.c.b16 %v255, %v254
  %v345 = vpack.c.b16 %v257, %v256
  %v346 = vpack.c.b16 %v259, %v258
  %v347 = vpack.c.b16 %v261, %v260
  %v348 = vpack.c.b16 %v263, %v262
  %v349 = vpack.c.b16 %v265, %v264
  %v350 = vpack.c.b16 %v267, %v266
  %v351 = vpack.c.b16 %v269, %v268
  %v352 = vpack.c.b16 %v271, %v270
  %v353 = vpack.c.b16 %v273, %v272
  %v354 = vpack.c.b16 %v275, %v274
  %v355 = vpack.c.b16 %v277, %v276
  %v356 = vpack.c.b16 %v279, %v278
  %v357 = vpack.c.b16 %v281, %v280
  %v358 = vpack.c.b16 %v283, %v282
  %v359 = vpack.c.b16 %v285, %v284
  %v360 = vpack.c.b16 %v287, %v286
  %v361 = vpack.c.b16 %v289, %v288
  %v362 = vpack.c.b16 %v291, %v290
  %v363 = vpack.c.b16 %v293, %v292
  %v364 = vpack.c.b16 %v295, %v294
  %v365 = vpack.c.b16 %v297, %v296
  %v366 = vpack.c.b16 %v299, %v298
  %v367 = vpack.c.b16 %v301, %v300
  %v368 = vpack.c.b16 %v303, %v302
  %v369 = vpack.c.b16 %v305, %v304
  %v370 = vpack.c.b16 %v307, %v306
  %v371 = vpack.c.b16 %v309, %v308
  %v372 = vpack.c.b16 %v311, %v310
  %v373 = vpack.c.b16 %v313, %v312
  %v374 = vpack.c.b16 %v315, %v314
  %v375 = vpack.c.b16 %v317, %v316
  %v376 = vpack.c.b16 %v319, %v318
  %v377 = vpack.c.b16 %v321, %v320
  %v378 = vpack.c.b16 %v323, %v322
  %v379 = vpack.c.b16 %v325, %v324
  %v380 = vpack.c.b16 %v327, %v326
  %v381 = vpack.c.b16 %v329, %v328
  %v382 = vpack.c.b16 %v331, %v330
  %v383 = vpack.c.b16 %v333, %v332
  %v384 = vpack.c.b16 %v335, %v334
  %v385 = vpack.c.b16 %v337, %v336
  %434 = vmatprep.subr.bf16.mxu0 0
  %435 = vmatpush1.bf16.msra.mxu0 %v345
  %436 = vmatprep.subr.bf16.mxu0 0
  %437 = vmatpush1.bf16.msra.mxu0 %v344
  %438 = vmatprep.subr.bf16.mxu0 0
  %439 = vmatpush1.bf16.msra.mxu0 %v343
  %440 = vmatprep.subr.bf16.mxu0 0
  %441 = vmatpush1.bf16.msra.mxu0 %v342
  %442 = vmatprep.subr.bf16.mxu0 0
  %443 = vmatpush1.bf16.msra.mxu0 %v341
  %444 = vmatprep.subr.bf16.mxu0 0
  %445 = vmatpush1.bf16.msra.mxu0 %v340
  %446 = vmatprep.subr.bf16.mxu0 0
  %447 = vmatpush1.bf16.msra.mxu0 %v339
  %448 = vmatprep.subr.bf16.mxu0 0
  %449 = vmatpush1.bf16.msra.mxu0 %v338
  %450 = vmatprep.subr.bf16.mxu0 0
  %451 = vmatpush2.bf16.msra.mxu0 %v353
  %452 = vmatprep.subr.bf16.mxu0 0
  %453 = vmatpush2.bf16.msra.mxu0 %v352
  %454 = vmatprep.subr.bf16.mxu0 0
  %455 = vmatpush2.bf16.msra.mxu0 %v351
  %456 = vmatprep.subr.bf16.mxu0 0
  %457 = vmatpush2.bf16.msra.mxu0 %v350
  %458 = vmatprep.subr.bf16.mxu0 0
  %459 = vmatpush2.bf16.msra.mxu0 %v349
  %460 = vmatprep.subr.bf16.mxu0 0
  %461 = vmatpush2.bf16.msra.mxu0 %v348
  %462 = vmatprep.subr.bf16.mxu0 0
  %463 = vmatpush2.bf16.msra.mxu0 %v347
  %464 = vmatprep.subr.bf16.mxu0 0
  %465 = vmatpush2.bf16.msra.mxu0 %v346
  %466 = vmatprep.mubr.bf16.mxu0 %v135
  %467 = vmatmul.mubr.bf16.gmra.mxu0 %v134
  %v468 = vpop.f32.mrf.mxu0
  %v469 = vadd.f32 %v124, %v468
  %v470 = vpop.f32.mrf.mxu0
  %v471 = vpop.f32.mrf.mxu0
  %v472 = vpop.f32.mrf.mxu0
  %473 = vdwg.mxu0
  %474 = vmatprep.subr.bf16.mxu0 0
  %475 = vmatpush1.bf16.msra.mxu0 %v361
  %476 = vmatprep.subr.bf16.mxu0 0
  %477 = vmatpush1.bf16.msra.mxu0 %v360
  %478 = vmatprep.subr.bf16.mxu0 0
  %479 = vmatpush1.bf16.msra.mxu0 %v359
  %480 = vmatprep.subr.bf16.mxu0 0
  %481 = vmatpush1.bf16.msra.mxu0 %v358
  %482 = vmatprep.subr.bf16.mxu0 0
  %483 = vmatpush1.bf16.msra.mxu0 %v357
  %484 = vmatprep.subr.bf16.mxu0 0
  %485 = vmatpush1.bf16.msra.mxu0 %v356
  %486 = vmatprep.subr.bf16.mxu0 0
  %487 = vmatpush1.bf16.msra.mxu0 %v355
  %488 = vmatprep.subr.bf16.mxu0 0
  %489 = vmatpush1.bf16.msra.mxu0 %v354
  %490 = vmatprep.subr.bf16.mxu0 0
  %491 = vmatpush2.bf16.msra.mxu0 %v369
  %492 = vmatprep.subr.bf16.mxu0 0
  %493 = vmatpush2.bf16.msra.mxu0 %v368
  %494 = vmatprep.subr.bf16.mxu0 0
  %495 = vmatpush2.bf16.msra.mxu0 %v367
  %496 = vmatprep.subr.bf16.mxu0 0
  %497 = vmatpush2.bf16.msra.mxu0 %v366
  %498 = vmatprep.subr.bf16.mxu0 0
  %499 = vmatpush2.bf16.msra.mxu0 %v365
  %500 = vmatprep.subr.bf16.mxu0 0
  %501 = vmatpush2.bf16.msra.mxu0 %v364
  %502 = vmatprep.subr.bf16.mxu0 0
  %503 = vmatpush2.bf16.msra.mxu0 %v363
  %504 = vmatprep.subr.bf16.mxu0 0
  %505 = vmatpush2.bf16.msra.mxu0 %v362
  %506 = vmatprep.mubr.bf16.mxu0 %v137
  %507 = vmatmul.mubr.bf16.gmra.mxu0 %v136
  %v508 = vpop.f32.mrf.mxu0
  %v509 = vadd.f32 %v469, %v508
  %v510 = vpop.f32.mrf.mxu0
  %v511 = vpop.f32.mrf.mxu0
  %v512 = vpop.f32.mrf.mxu0
  %513 = vdwg.mxu0
  %514 = vmatprep.subr.bf16.mxu0 0
  %515 = vmatpush1.bf16.msra.mxu0 %v377
  %516 = vmatprep.subr.bf16.mxu0 0
  %517 = vmatpush1.bf16.msra.mxu0 %v376
  %518 = vmatprep.subr.bf16.mxu0 0
  %519 = vmatpush1.bf16.msra.mxu0 %v375
  %520 = vmatprep.subr.bf16.mxu0 0
  %521 = vmatpush1.bf16.msra.mxu0 %v374
  %522 = vmatprep.subr.bf16.mxu0 0
  %523 = vmatpush1.bf16.msra.mxu0 %v373
  %524 = vmatprep.subr.bf16.mxu0 0
  %525 = vmatpush1.bf16.msra.mxu0 %v372
  %526 = vmatprep.subr.bf16.mxu0 0
  %527 = vmatpush1.bf16.msra.mxu0 %v371
  %528 = vmatprep.subr.bf16.mxu0 0
  %529 = vmatpush1.bf16.msra.mxu0 %v370
  %530 = vmatprep.subr.bf16.mxu0 0
  %531 = vmatpush2.bf16.msra.mxu0 %v385
  %532 = vmatprep.subr.bf16.mxu0 0
  %533 = vmatpush2.bf16.msra.mxu0 %v384
  %534 = vmatprep.subr.bf16.mxu0 0
  %535 = vmatpush2.bf16.msra.mxu0 %v383
  %536 = vmatprep.subr.bf16.mxu0 0
  %537 = vmatpush2.bf16.msra.mxu0 %v382
  %538 = vmatprep.subr.bf16.mxu0 0
  %539 = vmatpush2.bf16.msra.mxu0 %v381
  %540 = vmatprep.subr.bf16.mxu0 0
  %541 = vmatpush2.bf16.msra.mxu0 %v380
  %542 = vmatprep.subr.bf16.mxu0 0
  %543 = vmatpush2.bf16.msra.mxu0 %v379
  %544 = vmatprep.subr.bf16.mxu0 0
  %545 = vmatpush2.bf16.msra.mxu0 %v378
  %546 = vmatprep.mubr.bf16.mxu0 %v139
  %547 = vmatmul.mubr.bf16.gmra.mxu0 %v138
  %v548 = vpop.f32.mrf.mxu0
  %v549 = vadd.f32 %v509, %v548
  %v550 = vpop.f32.mrf.mxu0
  %v551 = vpop.f32.mrf.mxu0
  %v552 = vpop.f32.mrf.mxu0
  %553 = vdwg.mxu0
  %v554 = vmax.f32 %v549, 0.0
  %v555 = vpack.c.bf16 %v554, %v554
  %v556 = vld [vmem:[%s2] sm:$0xf]
  %v557 = vld [vmem:[%s2 + $0x4] sm:$0xf]
  %v558 = vld [vmem:[%s2 + $0x8] sm:$0xf]
  %v559 = vld [vmem:[%s2 + $0xc] sm:$0xf]
  %v560 = vlaneseq
  %v561 = vshrl.u32 %v560, 7
  %v562 = vsub.s32 1, %v561
  %v563 = vrot.slane %v24, %v562
  %v568 = vunpack.c.l.b16 %v556
  %v569 = vunpack.c.l.b16 %v557
  %v570 = vunpack.c.l.b16 %v558
  %v571 = vunpack.c.l.b16 %v559
  %v572 = vpack.c.b16 %v569, %v568
  %v573 = vpack.c.b16 %v571, %v570
  %vm576 = vcmask 261120
  %v578 = vsel %vm576, %v555, 0
  %580 = vmatprep.subr.bf16.mxu0 0
  %581 = vmatpush1.bf16.msra.mxu0 0
  %582 = vmatprep.subr.bf16.mxu0 0
  %583 = vmatpush1.bf16.msra.mxu0 0
  %584 = vmatprep.subr.bf16.mxu0 0
  %585 = vmatpush1.bf16.msra.mxu0 0
  %586 = vmatprep.subr.bf16.mxu0 0
  %587 = vmatpush1.bf16.msra.mxu0 0
  %588 = vmatprep.subr.bf16.mxu0 0
  %589 = vmatpush1.bf16.msra.mxu0 0
  %590 = vmatprep.subr.bf16.mxu0 0
  %591 = vmatpush1.bf16.msra.mxu0 0
  %592 = vmatprep.subr.bf16.mxu0 0
  %593 = vmatpush1.bf16.msra.mxu0 %v573
  %594 = vmatprep.subr.bf16.mxu0 0
  %595 = vmatpush1.bf16.msra.mxu0 %v572
  %596 = vmatprep.subr.bf16.mxu0 0
  %597 = vmatpush2.bf16.msra.mxu0 0
  %598 = vmatprep.subr.bf16.mxu0 0
  %599 = vmatpush2.bf16.msra.mxu0 0
  %600 = vmatprep.subr.bf16.mxu0 0
  %601 = vmatpush2.bf16.msra.mxu0 0
  %602 = vmatprep.subr.bf16.mxu0 0
  %603 = vmatpush2.bf16.msra.mxu0 0
  %604 = vmatprep.subr.bf16.mxu0 0
  %605 = vmatpush2.bf16.msra.mxu0 0
  %606 = vmatprep.subr.bf16.mxu0 0
  %607 = vmatpush2.bf16.msra.mxu0 0
  %608 = vmatprep.subr.bf16.mxu0 0
  %609 = vmatpush2.bf16.msra.mxu0 0
  %610 = vmatprep.subr.bf16.mxu0 0
  %611 = vmatpush2.bf16.msra.mxu0 0
  %612 = vmatprep.mubr.bf16.mxu0 0
  %613 = vmatmul.mubr.bf16.gmra.mxu0 %v578
  %v614 = vpop.f32.mrf.mxu0
  %v615 = vadd.f32 %v563, %v614
  %v616 = vpop.f32.mrf.mxu0
  %v617 = vpop.f32.mrf.mxu0
  %v618 = vpop.f32.mrf.mxu0
  %619 = vdwg.mxu0
  %v620 = vmax.f32 %v615, 0.0
  %v621 = vpack.c.bf16 %v620, %v620
  %v622 = vld [vmem:[%s3] sm:$0xf]
  %v623 = vld [vmem:[%s3 + $0x4] sm:$0xf]
  %v624 = vld [vmem:[%s3 + $0x8] sm:$0xf]
  %v625 = vld [vmem:[%s3 + $0xc] sm:$0xf]
  %v626 = vlaneseq
  %v627 = vshrl.u32 %v626, 7
  %v628 = vsub.s32 2, %v627
  %v629 = vrot.slane %v24, %v628
  %v634 = vunpack.c.l.b16 %v622
  %v635 = vunpack.c.l.b16 %v623
  %v636 = vunpack.c.l.b16 %v624
  %v637 = vunpack.c.l.b16 %v625
  %v638 = vpack.c.b16 %v635, %v634
  %v639 = vpack.c.b16 %v637, %v636
  %v643 = vsel %vm576, %v621, 0
  %645 = vmatprep.subr.bf16.mxu0 0
  %646 = vmatpush1.bf16.msra.mxu0 0
  %647 = vmatprep.subr.bf16.mxu0 0
  %648 = vmatpush1.bf16.msra.mxu0 0
  %649 = vmatprep.subr.bf16.mxu0 0
  %650 = vmatpush1.bf16.msra.mxu0 0
  %651 = vmatprep.subr.bf16.mxu0 0
  %652 = vmatpush1.bf16.msra.mxu0 0
  %653 = vmatprep.subr.bf16.mxu0 0
  %654 = vmatpush1.bf16.msra.mxu0 0
  %655 = vmatprep.subr.bf16.mxu0 0
  %656 = vmatpush1.bf16.msra.mxu0 0
  %657 = vmatprep.subr.bf16.mxu0 0
  %658 = vmatpush1.bf16.msra.mxu0 %v639
  %659 = vmatprep.subr.bf16.mxu0 0
  %660 = vmatpush1.bf16.msra.mxu0 %v638
  %661 = vmatprep.subr.bf16.mxu0 0
  %662 = vmatpush2.bf16.msra.mxu0 0
  %663 = vmatprep.subr.bf16.mxu0 0
  %664 = vmatpush2.bf16.msra.mxu0 0
  %665 = vmatprep.subr.bf16.mxu0 0
  %666 = vmatpush2.bf16.msra.mxu0 0
  %667 = vmatprep.subr.bf16.mxu0 0
  %668 = vmatpush2.bf16.msra.mxu0 0
  %669 = vmatprep.subr.bf16.mxu0 0
  %670 = vmatpush2.bf16.msra.mxu0 0
  %671 = vmatprep.subr.bf16.mxu0 0
  %672 = vmatpush2.bf16.msra.mxu0 0
  %673 = vmatprep.subr.bf16.mxu0 0
  %674 = vmatpush2.bf16.msra.mxu0 0
  %675 = vmatprep.subr.bf16.mxu0 0
  %676 = vmatpush2.bf16.msra.mxu0 0
  %677 = vmatprep.mubr.bf16.mxu0 0
  %678 = vmatmul.mubr.bf16.gmra.mxu0 %v643
  %v679 = vpop.f32.mrf.mxu0
  %v680 = vadd.f32 %v629, %v679
  %v681 = vpop.f32.mrf.mxu0
  %v682 = vpop.f32.mrf.mxu0
  %v683 = vpop.f32.mrf.mxu0
  %684 = vdwg.mxu0
  %vm685 = vcmask 15360
  %686 = vst.msk [vmem:[%s5] sm:$0xff] %vm685, %v680
  // Predicated region
  $region22: #{current_forward.1} parent=0 // pred_check
    _
  $region23: #{current_forward.1} parent=0 // pred_check_branch
    %688 = sbr.rel (0) target = $region25
  $region24: #{current_forward.1} parent=0 // pred_region
    _
  $region25: #{current_forward.1} parent=0 // pred_fallthru
    _
  // Predicated region
  $region26: #{current_forward.1} parent=0 // pred_check
    _
  $region27: #{current_forward.1} parent=0 // pred_check_branch
    %690 = sbr.rel (0) target = $region29
  $region28: #{current_forward.1} parent=0 // pred_region
    _
  $region29: #{current_forward.1} parent=0 // pred_fallthru
    _

</llo_original>
